<compile_context>
chip_gen: v7x
topology: tpu7x:2x2x1
jax: 0.10.0
libtpu: 0.0.40
codegen_flags: <defaults>
</compile_context>

<pallas_src>
import functools

import jax
import jax.numpy as jnp
import numpy as np
from jax.experimental import pallas as pl
from jax.experimental.pallas import tpu as pltpu


# ----------------------------------------------------------------------------
# Fused backbone (4x 1x1x1 conv + ReLU) + spatial-temporal average pool
# ----------------------------------------------------------------------------
def _fused_backbone_pool_kernel(x_ref, w1_ref, b1_ref, w2_ref, b2_ref,
                                w3_ref, b3_ref, w4_ref, b4_ref,
                                o_ref, acc_ref, *, inv_p):
    # x_ref: (1, Cin, tp) bf16    wN_ref: (CoutN, CinN) bf16    bN_ref: (CoutN, 1) f32
    # o_ref: (1, Cfeat, 1) f32    acc_ref: (Cfeat, tp) f32 scratch
    p = pl.program_id(1)

    @pl.when(p == 0)
    def _():
        acc_ref[...] = jnp.zeros_like(acc_ref)

    x = x_ref[0]                                                   # (Cin, tp) bf16

    h = jnp.dot(w1_ref[...], x, preferred_element_type=jnp.float32)
    h = jnp.maximum(h + b1_ref[...], 0.0)                          # f32 elementwise
    h = jnp.dot(w2_ref[...], h.astype(jnp.bfloat16),
                preferred_element_type=jnp.float32)
    h = jnp.maximum(h + b2_ref[...], 0.0)
    h = jnp.dot(w3_ref[...], h.astype(jnp.bfloat16),
                preferred_element_type=jnp.float32)
    h = jnp.maximum(h + b3_ref[...], 0.0)
    h = jnp.dot(w4_ref[...], h.astype(jnp.bfloat16),
                preferred_element_type=jnp.float32)
    h = jnp.maximum(h + b4_ref[...], 0.0)                          # (Cfeat, tp) f32

    # spatial_temporal_module: running sum over P tiles (VPU adds), scale once.
    acc_ref[...] += h

    @pl.when(p == pl.num_programs(1) - 1)
    def _():
        pooled = jnp.sum(acc_ref[...], axis=-1, keepdims=True) * inv_p  # (Cfeat, 1)
        o_ref[0] = pooled


def _choose_p_tile(P, max_tile=2048):
    """Largest multiple of 128 that divides P, capped; fallback: full P."""
    best = None
    t = 128
    while t <= min(P, max_tile):
        if P % t == 0:
            best = t
        t += 128
    return best if best is not None else P


def fused_backbone_pool(x, weights, biases):
    """x: (N, Cin, P) bf16.  Returns pooled features (N, Cfeat) f32."""
    N, Cin, P = x.shape
    Cfeat = weights[-1].shape[0]
    tp = _choose_p_tile(P)
    num_p = P // tp
    inv_p = 1.0 / float(P)

    w1, w2, w3, w4 = weights
    b1, b2, b3, b4 = biases

    def full_spec(a):
        return pl.BlockSpec(a.shape, lambda n, p: (0, 0))

    kernel = functools.partial(_fused_backbone_pool_kernel, inv_p=inv_p)
    out = pl.pallas_call(
        kernel,
        out_shape=jax.ShapeDtypeStruct((N, Cfeat, 1), jnp.float32),
        grid=(N, num_p),
        in_specs=[
            pl.BlockSpec((1, Cin, tp), lambda n, p: (n, 0, p)),
            full_spec(w1), full_spec(b1),
            full_spec(w2), full_spec(b2),
            full_spec(w3), full_spec(b3),
            full_spec(w4), full_spec(b4),
        ],
        out_specs=pl.BlockSpec((1, Cfeat, 1), lambda n, p: (n, 0, 0)),
        scratch_shapes=[pltpu.VMEM((Cfeat, tp), jnp.float32)],
        compiler_params=pltpu.CompilerParams(
            dimension_semantics=("parallel", "arbitrary"),
            # explicit budget: tiles are sized to fit v7x's 64 MiB VMEM as well
            vmem_limit_bytes=48 * 1024 * 1024,
        ),
    )(x, w1, b1, w2, b2, w3, b3, w4, b4)
    return out.reshape(N, Cfeat)


# ----------------------------------------------------------------------------
# Fused segmental consensus (mean over segments) + cls_head fc
# ----------------------------------------------------------------------------
def _consensus_fc_kernel(x_ref, w_ref, b_ref, feat_ref, score_ref):
    # x_ref: (B, num_seg, C)   w_ref: (C, K)   b_ref: (1, K)
    feat = jnp.mean(x_ref[...], axis=1)                            # (B, C)
    feat_ref[...] = feat
    # cls_head: dropout is identity at inference; fc on MXU.
    score_ref[...] = (
        jnp.dot(feat, w_ref[...], preferred_element_type=jnp.float32) + b_ref[...]
    )


def consensus_fc(pooled, w, b):
    """pooled: (B, num_seg, C) f32 -> (feat (B, C), cls_score (B, K))."""
    B, num_seg, C = pooled.shape
    K = w.shape[1]
    return pl.pallas_call(
        _consensus_fc_kernel,
        out_shape=(jax.ShapeDtypeStruct((B, C), jnp.float32),
                   jax.ShapeDtypeStruct((B, K), jnp.float32)),
        grid=(1,),
        in_specs=[
            pl.BlockSpec((B, num_seg, C), lambda i: (0, 0, 0)),
            pl.BlockSpec((C, K), lambda i: (0, 0)),
            pl.BlockSpec((1, K), lambda i: (0, 0)),
        ],
        out_specs=(pl.BlockSpec((B, C), lambda i: (0, 0)),
                   pl.BlockSpec((B, K), lambda i: (0, 0))),
        compiler_params=pltpu.CompilerParams(
            dimension_semantics=("arbitrary",)),
    )(pooled, w, b)


# ----------------------------------------------------------------------------
# Model wrapper
# ----------------------------------------------------------------------------
class TSN3DBBMTPallas:
    """Pallas re-implementation of TSN3D_bb_mt forward (test/inference path)."""

    def __init__(self, key, in_channels=3, num_classes=10,
                 stage_widths=(16, 24, 32, 32)):
        widths = (in_channels,) + tuple(stage_widths)
        keys = jax.random.split(key, 2 * len(stage_widths) + 2)
        self.backbone_w = []   # (Cout, Cin) bf16  -- so dot(W, X) is lane-dense
        self.backbone_b = []   # (Cout, 1)  f32
        for i in range(len(stage_widths)):
            cin, cout = widths[i], widths[i + 1]
            w = 0.05 * jax.random.normal(keys[2 * i], (cout, cin), jnp.float32)
            b = 0.01 * jax.random.normal(keys[2 * i + 1], (cout, 1), jnp.float32)
            self.backbone_w.append(w.astype(jnp.bfloat16))
            self.backbone_b.append(b)
        self.cls_w = 0.05 * jax.random.normal(
            keys[-2], (widths[-1], num_classes), jnp.float32)
        self.cls_b = 0.01 * jax.random.normal(
            keys[-1], (1, num_classes), jnp.float32)

    def forward(self, img_group_0, test=False, gt_label=None):
        # img_group_0: (B, num_seg, C, T, H, W)
        B = img_group_0.shape[0]
        img_group = img_group_0.reshape((-1,) + img_group_0.shape[2:])
        num_seg = img_group.shape[0] // B
        N, C, T, H, W = img_group.shape
        P = T * H * W

        # Lane-dense layout: NCDHW -> (N, C, T*H*W) is a pure reshape (no
        # transpose).  bf16 halves HBM traffic of the only large tensor.
        x = img_group.reshape(N, C, P).astype(jnp.bfloat16)

        # backbone (fused 4 stages) + spatial_temporal_module (global avg pool)
        # NOTE: only the last hooked feature is needed on this path (no
        # seg_head/flownet), so intermediates stay in VMEM.
        pooled = fused_backbone_pool(x, self.backbone_w, self.backbone_b)  # (N, Cfeat)

        # segmental_consensus (mean over segments, squeeze) + cls_head fc,
        # fused into one tiny kernel.
        pooled = pooled.reshape(B, num_seg, pooled.shape[-1])
        feat, cls_score = consensus_fc(pooled, self.cls_w, self.cls_b)

        if test:
            return cls_score            # forward_test returns class scores
        # forward_train with gt_label=None falls through and returns feat.
        # TODO(synk): training-time dropout, cross-entropy loss, seg_head and
        # flownet branches are not modelled (not built in this config path).
        return feat


# ----------------------------------------------------------------------------
# Pure-JAX reference (f32) for a sanity check
# ----------------------------------------------------------------------------
def _reference_forward(model, img_group_0):
    B = img_group_0.shape[0]
    img_group = img_group_0.reshape((-1,) + img_group_0.shape[2:])
    num_seg = img_group.shape[0] // B
    N, C, T, H, W = img_group.shape
    h = img_group.reshape(N, C, T * H * W).astype(jnp.float32)     # (N, C, P)
    for w, b in zip(model.backbone_w, model.backbone_b):
        h = jnp.maximum(jnp.einsum("oc,ncp->nop", w.astype(jnp.float32), h) + b, 0.0)
    pooled = jnp.mean(h, axis=-1)                                   # (N, Cfeat)
    feat = jnp.mean(pooled.reshape(B, num_seg, -1), axis=1)         # (B, Cfeat)
    score = feat @ model.cls_w + model.cls_b
    return feat, score


# ----------------------------------------------------------------------------
# Demo
# ----------------------------------------------------------------------------
if __name__ == "__main__":
    key = jax.random.PRNGKey(0)
    k_param, k_data = jax.random.split(key)

    B, num_seg, C, T, H, W = 2, 3, 3, 4, 8, 8
    num_classes = 10

    model = TSN3DBBMTPallas(k_param, in_channels=C, num_classes=num_classes)
    img_group = jax.random.normal(k_data, (B, num_seg, C, T, H, W), jnp.float32)

    cls_score = model.forward(img_group, test=True)
    cls_score = jax.block_until_ready(cls_score)
    assert cls_score.shape == (B, num_classes)

    feat = model.forward(img_group, test=False)
    feat = jax.block_until_ready(feat)
    assert feat.shape == (B, model.cls_w.shape[0])

    feat_ref, score_ref = _reference_forward(model, img_group)
    np.testing.assert_allclose(np.asarray(feat), np.asarray(feat_ref),
                               rtol=5e-2, atol=1e-3)
    np.testing.assert_allclose(np.asarray(cls_score), np.asarray(score_ref),
                               rtol=5e-2, atol=1e-3)

    print("KERNEL_OK")
</pallas_src>

<mosaic_0001>
module attributes {stable_mosaic.version = 11 : i64} {
  func.func @_fused_backbone_pool_kernel(%arg0: i32, %arg1: i32, %arg2: memref<1x3x256xbf16, #tpu.memory_space<vmem>>, %arg3: memref<16x3xbf16, #tpu.memory_space<vmem>>, %arg4: memref<16x1xf32, #tpu.memory_space<vmem>>, %arg5: memref<24x16xbf16, #tpu.memory_space<vmem>>, %arg6: memref<24x1xf32, #tpu.memory_space<vmem>>, %arg7: memref<32x24xbf16, #tpu.memory_space<vmem>>, %arg8: memref<32x1xf32, #tpu.memory_space<vmem>>, %arg9: memref<32x32xbf16, #tpu.memory_space<vmem>>, %arg10: memref<32x1xf32, #tpu.memory_space<vmem>>, %arg11: memref<1x32x1xf32, #tpu.memory_space<vmem>>, %arg12: memref<32x256xf32, #tpu.memory_space<vmem>>) attributes {dimension_semantics = [#tpu.dimension_semantics<parallel>, #tpu.dimension_semantics<arbitrary>], iteration_bounds = array<i64: 6, 1>, scalar_prefetch = 0 : i64, scratch_operands = 1 : i64, tpu.core_type = #tpu.core_type<tc>, window_params = [{transform_indices = @transform_0, window_bounds = array<i64: 1, 3, 256>}, {pipeline_mode = #tpu.pipeline_mode<synchronous>, transform_indices = @transform_1, window_bounds = array<i64: 16, 3>}, {pipeline_mode = #tpu.pipeline_mode<synchronous>, transform_indices = @transform_2, window_bounds = array<i64: 16, 1>}, {pipeline_mode = #tpu.pipeline_mode<synchronous>, transform_indices = @transform_3, window_bounds = array<i64: 24, 16>}, {pipeline_mode = #tpu.pipeline_mode<synchronous>, transform_indices = @transform_4, window_bounds = array<i64: 24, 1>}, {pipeline_mode = #tpu.pipeline_mode<synchronous>, transform_indices = @transform_5, window_bounds = array<i64: 32, 24>}, {pipeline_mode = #tpu.pipeline_mode<synchronous>, transform_indices = @transform_6, window_bounds = array<i64: 32, 1>}, {pipeline_mode = #tpu.pipeline_mode<synchronous>, transform_indices = @transform_7, window_bounds = array<i64: 32, 32>}, {pipeline_mode = #tpu.pipeline_mode<synchronous>, transform_indices = @transform_8, window_bounds = array<i64: 32, 1>}, {transform_indices = @transform_9, window_bounds = array<i64: 1, 32, 1>}]} {
    %c0_i32 = arith.constant 0 : i32
    %0 = arith.cmpi eq, %arg1, %c0_i32 : i32
    %1 = arith.extui %0 : i1 to i32
    %c0_i32_0 = arith.constant 0 : i32
    %2 = arith.cmpi ne, %1, %c0_i32_0 : i32
    scf.if %2 {
      %cst_32 = arith.constant 0.000000e+00 : f32
      %42 = vector.broadcast %cst_32 : f32 to vector<32x256xf32>
      %c0_33 = arith.constant 0 : index
      %c0_34 = arith.constant 0 : index
      %43 = vector.load %arg12[%c0_33, %c0_34] : memref<32x256xf32, #tpu.memory_space<vmem>>, vector<32x256xf32>
      tpu.vector_store %arg12[%c0_33, %c0_34], %42 {strides = array<i32>} : memref<32x256xf32, #tpu.memory_space<vmem>>, vector<32x256xf32>,
    } else {
    }
    %c0 = arith.constant 0 : index
    %c0_1 = arith.constant 0 : index
    %c0_2 = arith.constant 0 : index
    %3 = vector.load %arg2[%c0, %c0_1, %c0_2] : memref<1x3x256xbf16, #tpu.memory_space<vmem>>, vector<1x3x256xbf16>
    %4 = vector.shape_cast %3 : vector<1x3x256xbf16> to vector<3x256xbf16>
    %c0_3 = arith.constant 0 : index
    %c0_4 = arith.constant 0 : index
    %5 = vector.load %arg3[%c0_3, %c0_4] : memref<16x3xbf16, #tpu.memory_space<vmem>>, vector<16x3xbf16>
    %cst = arith.constant dense<0.000000e+00> : vector<16x256xf32>
    %6 = tpu.matmul %5, %4, %cst {dimension_numbers = #tpu.dot_dimension_numbers<[1], [0], [0], [1], [0, 0, 1, 1], [], []>} : vector<16x3xbf16>, vector<3x256xbf16>, vector<16x256xf32> -> vector<16x256xf32>
    %c0_5 = arith.constant 0 : index
    %c0_6 = arith.constant 0 : index
    %7 = vector.load %arg4[%c0_5, %c0_6] : memref<16x1xf32, #tpu.memory_space<vmem>>, vector<16x1xf32>
    %8 = vector.broadcast %7 : vector<16x1xf32> to vector<16x256xf32>
    %9 = arith.addf %6, %8 : vector<16x256xf32>
    %cst_7 = arith.constant 0.000000e+00 : f32
    %10 = vector.broadcast %cst_7 : f32 to vector<16x256xf32>
    %11 = arith.maximumf %9, %10 : vector<16x256xf32>
    %c0_8 = arith.constant 0 : index
    %c0_9 = arith.constant 0 : index
    %12 = vector.load %arg5[%c0_8, %c0_9] : memref<24x16xbf16, #tpu.memory_space<vmem>>, vector<24x16xbf16>
    %13 = arith.truncf %11 : vector<16x256xf32> to vector<16x256xbf16>
    %cst_10 = arith.constant dense<0.000000e+00> : vector<24x256xf32>
    %14 = tpu.matmul %12, %13, %cst_10 {dimension_numbers = #tpu.dot_dimension_numbers<[1], [0], [0], [1], [0, 0, 1, 1], [], []>} : vector<24x16xbf16>, vector<16x256xbf16>, vector<24x256xf32> -> vector<24x256xf32>
    %c0_11 = arith.constant 0 : index
    %c0_12 = arith.constant 0 : index
    %15 = vector.load %arg6[%c0_11, %c0_12] : memref<24x1xf32, #tpu.memory_space<vmem>>, vector<24x1xf32>
    %16 = vector.broadcast %15 : vector<24x1xf32> to vector<24x256xf32>
    %17 = arith.addf %14, %16 : vector<24x256xf32>
    %cst_13 = arith.constant 0.000000e+00 : f32
    %18 = vector.broadcast %cst_13 : f32 to vector<24x256xf32>
    %19 = arith.maximumf %17, %18 : vector<24x256xf32>
    %c0_14 = arith.constant 0 : index
    %c0_15 = arith.constant 0 : index
    %20 = vector.load %arg7[%c0_14, %c0_15] : memref<32x24xbf16, #tpu.memory_space<vmem>>, vector<32x24xbf16>
    %21 = arith.truncf %19 : vector<24x256xf32> to vector<24x256xbf16>
    %cst_16 = arith.constant dense<0.000000e+00> : vector<32x256xf32>
    %22 = tpu.matmul %20, %21, %cst_16 {dimension_numbers = #tpu.dot_dimension_numbers<[1], [0], [0], [1], [0, 0, 1, 1], [], []>} : vector<32x24xbf16>, vector<24x256xbf16>, vector<32x256xf32> -> vector<32x256xf32>
    %c0_17 = arith.constant 0 : index
    %c0_18 = arith.constant 0 : index
    %23 = vector.load %arg8[%c0_17, %c0_18] : memref<32x1xf32, #tpu.memory_space<vmem>>, vector<32x1xf32>
    %24 = vector.broadcast %23 : vector<32x1xf32> to vector<32x256xf32>
    %25 = arith.addf %22, %24 : vector<32x256xf32>
    %cst_19 = arith.constant 0.000000e+00 : f32
    %26 = vector.broadcast %cst_19 : f32 to vector<32x256xf32>
    %27 = arith.maximumf %25, %26 : vector<32x256xf32>
    %c0_20 = arith.constant 0 : index
    %c0_21 = arith.constant 0 : index
    %28 = vector.load %arg9[%c0_20, %c0_21] : memref<32x32xbf16, #tpu.memory_space<vmem>>, vector<32x32xbf16>
    %29 = arith.truncf %27 : vector<32x256xf32> to vector<32x256xbf16>
    %cst_22 = arith.constant dense<0.000000e+00> : vector<32x256xf32>
    %30 = tpu.matmul %28, %29, %cst_22 {dimension_numbers = #tpu.dot_dimension_numbers<[1], [0], [0], [1], [0, 0, 1, 1], [], []>} : vector<32x32xbf16>, vector<32x256xbf16>, vector<32x256xf32> -> vector<32x256xf32>
    %c0_23 = arith.constant 0 : index
    %c0_24 = arith.constant 0 : index
    %31 = vector.load %arg10[%c0_23, %c0_24] : memref<32x1xf32, #tpu.memory_space<vmem>>, vector<32x1xf32>
    %32 = vector.broadcast %31 : vector<32x1xf32> to vector<32x256xf32>
    %33 = arith.addf %30, %32 : vector<32x256xf32>
    %cst_25 = arith.constant 0.000000e+00 : f32
    %34 = vector.broadcast %cst_25 : f32 to vector<32x256xf32>
    %35 = arith.maximumf %33, %34 : vector<32x256xf32>
    %c0_26 = arith.constant 0 : index
    %c0_27 = arith.constant 0 : index
    %36 = vector.load %arg12[%c0_26, %c0_27] : memref<32x256xf32, #tpu.memory_space<vmem>>, vector<32x256xf32>
    %37 = arith.addf %36, %35 : vector<32x256xf32>
    %c0_28 = arith.constant 0 : index
    %c0_29 = arith.constant 0 : index
    %38 = vector.load %arg12[%c0_28, %c0_29] : memref<32x256xf32, #tpu.memory_space<vmem>>, vector<32x256xf32>
    tpu.vector_store %arg12[%c0_28, %c0_29], %37 {strides = array<i32>} : memref<32x256xf32, #tpu.memory_space<vmem>>, vector<32x256xf32>,
    %c0_i32_30 = arith.constant 0 : i32
    %39 = arith.cmpi eq, %arg1, %c0_i32_30 : i32
    %40 = arith.extui %39 : i1 to i32
    %c0_i32_31 = arith.constant 0 : i32
    %41 = arith.cmpi ne, %40, %c0_i32_31 : i32
    scf.if %41 {
      %c0_32 = arith.constant 0 : index
      %c0_33 = arith.constant 0 : index
      %42 = vector.load %arg12[%c0_32, %c0_33] : memref<32x256xf32, #tpu.memory_space<vmem>>, vector<32x256xf32>
      %cst_34 = arith.constant dense<0.000000e+00> : vector<32xf32>
      %43 = vector.multi_reduction <add>, %42, %cst_34 [1] : vector<32x256xf32> to vector<32xf32>
      %44 = vector.shape_cast %43 : vector<32xf32> to vector<32x1xf32>
      %cst_35 = arith.constant 3.906250e-03 : f32
      %45 = vector.broadcast %cst_35 : f32 to vector<32x1xf32>
      %46 = arith.mulf %44, %45 : vector<32x1xf32>
      %c0_36 = arith.constant 0 : index
      %c0_37 = arith.constant 0 : index
      %c0_38 = arith.constant 0 : index
      %47 = vector.load %arg11[%c0_36, %c0_37, %c0_38] : memref<1x32x1xf32, #tpu.memory_space<vmem>>, vector<1x32x1xf32>
      %48 = vector.shape_cast %47 : vector<1x32x1xf32> to vector<32x1xf32>
      %49 = vector.shape_cast %46 : vector<32x1xf32> to vector<1x32x1xf32>
      tpu.vector_store %arg11[%c0_36, %c0_37, %c0_38], %49 {strides = array<i32>} : memref<1x32x1xf32, #tpu.memory_space<vmem>>, vector<1x32x1xf32>,
    } else {
    }
    return
  }
  func.func @transform_0(%arg0: i32, %arg1: i32) -> (i32, i32, i32) {
    %c0_i32 = arith.constant 0 : i32
    %c0_i32_0 = arith.constant 0 : i32
    return %arg0, %c0_i32, %arg1 : i32, i32, i32
  }
  func.func @transform_1(%arg0: i32, %arg1: i32) -> (i32, i32) {
    %c0_i32 = arith.constant 0 : i32
    %c0_i32_0 = arith.constant 0 : i32
    %c0_i32_1 = arith.constant 0 : i32
    return %c0_i32, %c0_i32_0 : i32, i32
  }
  func.func @transform_2(%arg0: i32, %arg1: i32) -> (i32, i32) {
    %c0_i32 = arith.constant 0 : i32
    %c0_i32_0 = arith.constant 0 : i32
    %c0_i32_1 = arith.constant 0 : i32
    return %c0_i32, %c0_i32_0 : i32, i32
  }
  func.func @transform_3(%arg0: i32, %arg1: i32) -> (i32, i32) {
    %c0_i32 = arith.constant 0 : i32
    %c0_i32_0 = arith.constant 0 : i32
    %c0_i32_1 = arith.constant 0 : i32
    return %c0_i32, %c0_i32_0 : i32, i32
  }
  func.func @transform_4(%arg0: i32, %arg1: i32) -> (i32, i32) {
    %c0_i32 = arith.constant 0 : i32
    %c0_i32_0 = arith.constant 0 : i32
    %c0_i32_1 = arith.constant 0 : i32
    return %c0_i32, %c0_i32_0 : i32, i32
  }
  func.func @transform_5(%arg0: i32, %arg1: i32) -> (i32, i32) {
    %c0_i32 = arith.constant 0 : i32
    %c0_i32_0 = arith.constant 0 : i32
    %c0_i32_1 = arith.constant 0 : i32
    return %c0_i32, %c0_i32_0 : i32, i32
  }
  func.func @transform_6(%arg0: i32, %arg1: i32) -> (i32, i32) {
    %c0_i32 = arith.constant 0 : i32
    %c0_i32_0 = arith.constant 0 : i32
    %c0_i32_1 = arith.constant 0 : i32
    return %c0_i32, %c0_i32_0 : i32, i32
  }
  func.func @transform_7(%arg0: i32, %arg1: i32) -> (i32, i32) {
    %c0_i32 = arith.constant 0 : i32
    %c0_i32_0 = arith.constant 0 : i32
    %c0_i32_1 = arith.constant 0 : i32
    return %c0_i32, %c0_i32_0 : i32, i32
  }
  func.func @transform_8(%arg0: i32, %arg1: i32) -> (i32, i32) {
    %c0_i32 = arith.constant 0 : i32
    %c0_i32_0 = arith.constant 0 : i32
    %c0_i32_1 = arith.constant 0 : i32
    return %c0_i32, %c0_i32_0 : i32, i32
  }
  func.func @transform_9(%arg0: i32, %arg1: i32) -> (i32, i32, i32) {
    %c0_i32 = arith.constant 0 : i32
    %c0_i32_0 = arith.constant 0 : i32
    %c0_i32_1 = arith.constant 0 : i32
    return %arg0, %c0_i32, %c0_i32_0 : i32, i32, i32
  }
}

</mosaic_0001>

<llo_original>
// kernel: tpu_custom_call.1
$region0: #{tpu_custom_call.1}
  #allocation0 [shape = 'u32[]', space=smem, size = 0x4, offset = 0x4, fixed_abs, tag = 'smem constant byte address 0x4 - core index']
  #allocation1 [shape = 'u32[144,128]{1,0:T(1,128)}', space=vmem, size = 0x12000, scoped, tag = 'internal scratch']
  #allocation2 [shape = 'f32[32,256]{1,0:T(8,128)}', space=vmem, size = 0x8000, scoped, tag = 'scratch operand']
  %s0 = inlined_call_operand.vmem [shape: bf16[6,3,256], index: 0, kind: input, shape index: {}]
  %s1 = inlined_call_operand.vmem [shape: bf16[16,3], index: 1, kind: input, shape index: {}]
  %s2 = inlined_call_operand.vmem [shape: f32[16,1], index: 2, kind: input, shape index: {}]
  %s3 = inlined_call_operand.vmem [shape: bf16[24,16], index: 3, kind: input, shape index: {}]
  %s4 = inlined_call_operand.vmem [shape: f32[24,1], index: 4, kind: input, shape index: {}]
  %s5 = inlined_call_operand.vmem [shape: bf16[32,24], index: 5, kind: input, shape index: {}]
  %s6 = inlined_call_operand.vmem [shape: f32[32,1], index: 6, kind: input, shape index: {}]
  %s7 = inlined_call_operand.vmem [shape: bf16[32,32], index: 7, kind: input, shape index: {}]
  %s8 = inlined_call_operand.vmem [shape: f32[32,1], index: 8, kind: input, shape index: {}]
  %s9 = inlined_call_operand.vmem [shape: f32[6,32,1], index: 9, kind: output, shape index: {}]
  %s10 = sld [smem:[#allocation0]]
  $region77: #{tpu_custom_call.1} parent=0
    _
  %s12 = ssub.s32 1, %s10
  %s13 = scalar_select 0, %s12, %s10
  loop: start=0, step=1, limit=8
  $region2: #{tpu_custom_call.1} parent=0 // loop_pre_header
    _
  $region3: #{tpu_custom_call.1} parent=0 // loop_header
    %s15 = sphi 0, %s19
    %p16 = scmp.ge.s32.totalorder %s15, 8
    %s22 = sphi 0, %s34
    %s23 = sphi 0, %s30
    %s24 = sphi 0, %s22
    %s25 = sphi 0, %s23
    %s26 = sphi 0, %s24
    %s27 = sphi 0, %s25
    %s39 = sphi 0, %s41
    %s42 = sphi 0, %s39
    %s43 = sphi 0, %s42
    %s59 = sphi 0, %s43
    %s63 = sphi 0, %s63
    %s65 = sphi 0, %s63
    %s66 = sphi 0, %s65
    %s80 = sphi 0, %s66
    %s84 = sphi 0, %s84
    %s86 = sphi 0, %s84
    %s87 = sphi 0, %s86
    %s101 = sphi 0, %s87
    %s105 = sphi 0, %s105
    %s107 = sphi 0, %s105
    %s108 = sphi 0, %s107
    %s122 = sphi 0, %s108
    %s126 = sphi 0, %s126
    %s128 = sphi 0, %s126
    %s129 = sphi 0, %s128
    %s143 = sphi 0, %s129
    %s147 = sphi 0, %s147
    %s149 = sphi 0, %s147
    %s150 = sphi 0, %s149
    %s164 = sphi 0, %s150
    %s168 = sphi 0, %s168
    %s170 = sphi 0, %s168
    %s171 = sphi 0, %s170
    %s185 = sphi 0, %s171
    %s189 = sphi 0, %s189
    %s191 = sphi 0, %s189
    %s192 = sphi 0, %s191
    %s206 = sphi 0, %s192
    %s210 = sphi 0, %s210
    %s212 = sphi 0, %s210
    %s213 = sphi 0, %s212
    %s227 = sphi 0, %s213
    %s233 = sphi 0, %s235
    %s236 = sphi 0, %s233
    %s237 = sphi 0, %s236
    %s253 = sphi 0, %s237
  $region4: #{tpu_custom_call.1} parent=0 // loop_header_branch
    %18 = sbr.rel (%p16) target = $region8
  $region5: #{tpu_custom_call.1} parent=0 // loop_body
    %s20 = ssub.s32 %s15, 1
    %s21 = ssub.s32 %s15, 2
    %s28 = sadd.s32 1, %s23
    %p29 = scmp.ge.s32.totalorder %s28, 1
    %s30 = scalar_select %p29, 0, %s28
    %s31 = sadd.s32 1, %s22
    %s32 = scalar_select %p29, %s31, %s22
    %p33 = scmp.ge.s32.totalorder %s32, 6
    %s34 = scalar_select %p33, 0, %s32
    %s35 = ssub.s32 %s22, %s34
    %s36 = ssub.s32 %s23, %s30
    %s37 = sor.u32 %s35, %s36
    %p38 = scmp.eq.s32.totalorder %s37, 0
    %s40 = sadd.s32 %s39, 1
    %s41 = scalar_select %p38, %s39, %s40
    %p44 = pneg %p38
    %p45 = scmp.eq.s32.totalorder %s15, 5
    %p46 = por %p44, %p45
    %p47 = scmp.ne.s32.totalorder %s39, %s42
    %p48 = scmp.eq.s32.totalorder %s15, 0
    %p49 = por %p47, %p48
    %p50 = scmp.ne.s32.totalorder %s39, %s42
    %p51 = scmp.eq.s32.totalorder %s20, 5
    %p52 = por %p50, %p51
    %p53 = scmp.ne.s32.totalorder %s42, %s43
    %p54 = scmp.eq.s32.totalorder %s20, 0
    %p55 = por %p53, %p54
    %p56 = scmp.ne.s32.totalorder %s42, %s43
    %p57 = scmp.eq.s32.totalorder %s21, 5
    %p58 = por %p56, %p57
    %p60 = scmp.ne.s32.totalorder %s43, %s59
    %p61 = scmp.eq.s32.totalorder %s21, 0
    %p62 = por %p60, %p61
    %s64 = sadd.s32 %s63, 1
    %p67 = scmp.eq.s32.totalorder %s15, 5
    %p68 = scmp.ne.s32.totalorder %s63, %s65
    %p69 = scmp.eq.s32.totalorder %s15, 0
    %p70 = por %p68, %p69
    %p71 = scmp.ne.s32.totalorder %s63, %s65
    %p72 = scmp.eq.s32.totalorder %s20, 5
    %p73 = por %p71, %p72
    %p74 = scmp.ne.s32.totalorder %s65, %s66
    %p75 = scmp.eq.s32.totalorder %s20, 0
    %p76 = por %p74, %p75
    %p77 = scmp.ne.s32.totalorder %s65, %s66
    %p78 = scmp.eq.s32.totalorder %s21, 5
    %p79 = por %p77, %p78
    %p81 = scmp.ne.s32.totalorder %s66, %s80
    %p82 = scmp.eq.s32.totalorder %s21, 0
    %p83 = por %p81, %p82
    %s85 = sadd.s32 %s84, 1
    %p88 = scmp.eq.s32.totalorder %s15, 5
    %p89 = scmp.ne.s32.totalorder %s84, %s86
    %p90 = scmp.eq.s32.totalorder %s15, 0
    %p91 = por %p89, %p90
    %p92 = scmp.ne.s32.totalorder %s84, %s86
    %p93 = scmp.eq.s32.totalorder %s20, 5
    %p94 = por %p92, %p93
    %p95 = scmp.ne.s32.totalorder %s86, %s87
    %p96 = scmp.eq.s32.totalorder %s20, 0
    %p97 = por %p95, %p96
    %p98 = scmp.ne.s32.totalorder %s86, %s87
    %p99 = scmp.eq.s32.totalorder %s21, 5
    %p100 = por %p98, %p99
    %p102 = scmp.ne.s32.totalorder %s87, %s101
    %p103 = scmp.eq.s32.totalorder %s21, 0
    %p104 = por %p102, %p103
    %s106 = sadd.s32 %s105, 1
    %p109 = scmp.eq.s32.totalorder %s15, 5
    %p110 = scmp.ne.s32.totalorder %s105, %s107
    %p111 = scmp.eq.s32.totalorder %s15, 0
    %p112 = por %p110, %p111
    %p113 = scmp.ne.s32.totalorder %s105, %s107
    %p114 = scmp.eq.s32.totalorder %s20, 5
    %p115 = por %p113, %p114
    %p116 = scmp.ne.s32.totalorder %s107, %s108
    %p117 = scmp.eq.s32.totalorder %s20, 0
    %p118 = por %p116, %p117
    %p119 = scmp.ne.s32.totalorder %s107, %s108
    %p120 = scmp.eq.s32.totalorder %s21, 5
    %p121 = por %p119, %p120
    %p123 = scmp.ne.s32.totalorder %s108, %s122
    %p124 = scmp.eq.s32.totalorder %s21, 0
    %p125 = por %p123, %p124
    %s127 = sadd.s32 %s126, 1
    %p130 = scmp.eq.s32.totalorder %s15, 5
    %p131 = scmp.ne.s32.totalorder %s126, %s128
    %p132 = scmp.eq.s32.totalorder %s15, 0
    %p133 = por %p131, %p132
    %p134 = scmp.ne.s32.totalorder %s126, %s128
    %p135 = scmp.eq.s32.totalorder %s20, 5
    %p136 = por %p134, %p135
    %p137 = scmp.ne.s32.totalorder %s128, %s129
    %p138 = scmp.eq.s32.totalorder %s20, 0
    %p139 = por %p137, %p138
    %p140 = scmp.ne.s32.totalorder %s128, %s129
    %p141 = scmp.eq.s32.totalorder %s21, 5
    %p142 = por %p140, %p141
    %p144 = scmp.ne.s32.totalorder %s129, %s143
    %p145 = scmp.eq.s32.totalorder %s21, 0
    %p146 = por %p144, %p145
    %s148 = sadd.s32 %s147, 1
    %p151 = scmp.eq.s32.totalorder %s15, 5
    %p152 = scmp.ne.s32.totalorder %s147, %s149
    %p153 = scmp.eq.s32.totalorder %s15, 0
    %p154 = por %p152, %p153
    %p155 = scmp.ne.s32.totalorder %s147, %s149
    %p156 = scmp.eq.s32.totalorder %s20, 5
    %p157 = por %p155, %p156
    %p158 = scmp.ne.s32.totalorder %s149, %s150
    %p159 = scmp.eq.s32.totalorder %s20, 0
    %p160 = por %p158, %p159
    %p161 = scmp.ne.s32.totalorder %s149, %s150
    %p162 = scmp.eq.s32.totalorder %s21, 5
    %p163 = por %p161, %p162
    %p165 = scmp.ne.s32.totalorder %s150, %s164
    %p166 = scmp.eq.s32.totalorder %s21, 0
    %p167 = por %p165, %p166
    %s169 = sadd.s32 %s168, 1
    %p172 = scmp.eq.s32.totalorder %s15, 5
    %p173 = scmp.ne.s32.totalorder %s168, %s170
    %p174 = scmp.eq.s32.totalorder %s15, 0
    %p175 = por %p173, %p174
    %p176 = scmp.ne.s32.totalorder %s168, %s170
    %p177 = scmp.eq.s32.totalorder %s20, 5
    %p178 = por %p176, %p177
    %p179 = scmp.ne.s32.totalorder %s170, %s171
    %p180 = scmp.eq.s32.totalorder %s20, 0
    %p181 = por %p179, %p180
    %p182 = scmp.ne.s32.totalorder %s170, %s171
    %p183 = scmp.eq.s32.totalorder %s21, 5
    %p184 = por %p182, %p183
    %p186 = scmp.ne.s32.totalorder %s171, %s185
    %p187 = scmp.eq.s32.totalorder %s21, 0
    %p188 = por %p186, %p187
    %s190 = sadd.s32 %s189, 1
    %p193 = scmp.eq.s32.totalorder %s15, 5
    %p194 = scmp.ne.s32.totalorder %s189, %s191
    %p195 = scmp.eq.s32.totalorder %s15, 0
    %p196 = por %p194, %p195
    %p197 = scmp.ne.s32.totalorder %s189, %s191
    %p198 = scmp.eq.s32.totalorder %s20, 5
    %p199 = por %p197, %p198
    %p200 = scmp.ne.s32.totalorder %s191, %s192
    %p201 = scmp.eq.s32.totalorder %s20, 0
    %p202 = por %p200, %p201
    %p203 = scmp.ne.s32.totalorder %s191, %s192
    %p204 = scmp.eq.s32.totalorder %s21, 5
    %p205 = por %p203, %p204
    %p207 = scmp.ne.s32.totalorder %s192, %s206
    %p208 = scmp.eq.s32.totalorder %s21, 0
    %p209 = por %p207, %p208
    %s211 = sadd.s32 %s210, 1
    %p214 = scmp.eq.s32.totalorder %s15, 5
    %p215 = scmp.ne.s32.totalorder %s210, %s212
    %p216 = scmp.eq.s32.totalorder %s15, 0
    %p217 = por %p215, %p216
    %p218 = scmp.ne.s32.totalorder %s210, %s212
    %p219 = scmp.eq.s32.totalorder %s20, 5
    %p220 = por %p218, %p219
    %p221 = scmp.ne.s32.totalorder %s212, %s213
    %p222 = scmp.eq.s32.totalorder %s20, 0
    %p223 = por %p221, %p222
    %p224 = scmp.ne.s32.totalorder %s212, %s213
    %p225 = scmp.eq.s32.totalorder %s21, 5
    %p226 = por %p224, %p225
    %p228 = scmp.ne.s32.totalorder %s213, %s227
    %p229 = scmp.eq.s32.totalorder %s21, 0
    %p230 = por %p228, %p229
    %s231 = ssub.s32 %s22, %s34
    %p232 = scmp.eq.s32.totalorder %s231, 0
    %s234 = sadd.s32 %s233, 1
    %s235 = scalar_select %p232, %s233, %s234
    %p238 = pneg %p232
    %p239 = scmp.eq.s32.totalorder %s15, 5
    %p240 = por %p238, %p239
    %p241 = scmp.ne.s32.totalorder %s233, %s236
    %p242 = scmp.eq.s32.totalorder %s15, 0
    %p243 = por %p241, %p242
    %p244 = scmp.ne.s32.totalorder %s233, %s236
    %p245 = scmp.eq.s32.totalorder %s20, 5
    %p246 = por %p244, %p245
    %p247 = scmp.ne.s32.totalorder %s236, %s237
    %p248 = scmp.eq.s32.totalorder %s20, 0
    %p249 = por %p247, %p248
    %p250 = scmp.ne.s32.totalorder %s236, %s237
    %p251 = scmp.eq.s32.totalorder %s21, 5
    %p252 = por %p250, %p251
    %p254 = scmp.ne.s32.totalorder %s237, %s253
    %p255 = scmp.eq.s32.totalorder %s21, 0
    %p256 = por %p254, %p255
    %p257 = scmp.le.s32.totalorder 1, %s15
    %p258 = scmp.lt.s32.totalorder %s15, 7
    %p259 = pnand %p257, %p258
    %p260 = pneg %p259
    // Predicated region
    $region9: #{tpu_custom_call.1} parent=5 // pred_check
      _
    $region10: #{tpu_custom_call.1} parent=5 // pred_check_branch
      %262 = sbr.rel (%p259) target = $region12
    $region11: #{tpu_custom_call.1} parent=5 // pred_region
      %s263 = ssub.s32 %s15, 1
      // Predicated region
      $region13: #{tpu_custom_call.1} parent=11 // pred_check
        %p264 = pneg %p76
      $region14: #{tpu_custom_call.1} parent=11 // pred_check_branch
        %266 = sbr.rel (%p264) target = $region16
      $region15: #{tpu_custom_call.1} parent=11 // pred_region
        _
      $region16: #{tpu_custom_call.1} parent=11 // pred_fallthru
        _
      // Predicated region
      $region17: #{tpu_custom_call.1} parent=11 // pred_check
        %p267 = pneg %p97
      $region18: #{tpu_custom_call.1} parent=11 // pred_check_branch
        %269 = sbr.rel (%p267) target = $region20
      $region19: #{tpu_custom_call.1} parent=11 // pred_region
        _
      $region20: #{tpu_custom_call.1} parent=11 // pred_fallthru
        _
      // Predicated region
      $region21: #{tpu_custom_call.1} parent=11 // pred_check
        %p270 = pneg %p118
      $region22: #{tpu_custom_call.1} parent=11 // pred_check_branch
        %272 = sbr.rel (%p270) target = $region24
      $region23: #{tpu_custom_call.1} parent=11 // pred_region
        _
      $region24: #{tpu_custom_call.1} parent=11 // pred_fallthru
        _
      // Predicated region
      $region25: #{tpu_custom_call.1} parent=11 // pred_check
        %p273 = pneg %p139
      $region26: #{tpu_custom_call.1} parent=11 // pred_check_branch
        %275 = sbr.rel (%p273) target = $region28
      $region27: #{tpu_custom_call.1} parent=11 // pred_region
        _
      $region28: #{tpu_custom_call.1} parent=11 // pred_fallthru
        _
      // Predicated region
      $region29: #{tpu_custom_call.1} parent=11 // pred_check
        %p276 = pneg %p160
      $region30: #{tpu_custom_call.1} parent=11 // pred_check_branch
        %278 = sbr.rel (%p276) target = $region32
      $region31: #{tpu_custom_call.1} parent=11 // pred_region
        _
      $region32: #{tpu_custom_call.1} parent=11 // pred_fallthru
        _
      // Predicated region
      $region33: #{tpu_custom_call.1} parent=11 // pred_check
        %p279 = pneg %p181
      $region34: #{tpu_custom_call.1} parent=11 // pred_check_branch
        %281 = sbr.rel (%p279) target = $region36
      $region35: #{tpu_custom_call.1} parent=11 // pred_region
        _
      $region36: #{tpu_custom_call.1} parent=11 // pred_fallthru
        _
      // Predicated region
      $region37: #{tpu_custom_call.1} parent=11 // pred_check
        %p282 = pneg %p202
      $region38: #{tpu_custom_call.1} parent=11 // pred_check_branch
        %284 = sbr.rel (%p282) target = $region40
      $region39: #{tpu_custom_call.1} parent=11 // pred_region
        _
      $region40: #{tpu_custom_call.1} parent=11 // pred_fallthru
        _
      // Predicated region
      $region41: #{tpu_custom_call.1} parent=11 // pred_check
        %p285 = pneg %p223
      $region42: #{tpu_custom_call.1} parent=11 // pred_check_branch
        %287 = sbr.rel (%p285) target = $region44
      $region43: #{tpu_custom_call.1} parent=11 // pred_region
        _
      $region44: #{tpu_custom_call.1} parent=11 // pred_fallthru
        _
    $region12: #{tpu_custom_call.1} parent=5 // pred_fallthru
      _
    %p288 = scmp.lt.s32.totalorder %s15, 6
    // Predicated region
    $region45: #{tpu_custom_call.1} parent=5 // pred_check
      %p289 = pneg %p288
    $region46: #{tpu_custom_call.1} parent=5 // pred_check_branch
      %291 = sbr.rel (%p289) target = $region48
    $region47: #{tpu_custom_call.1} parent=5 // pred_region
      // Predicated region
      $region49: #{tpu_custom_call.1} parent=47 // pred_check
        %p292 = pneg %p49
      $region50: #{tpu_custom_call.1} parent=47 // pred_check_branch
        %294 = sbr.rel (%p292) target = $region52
      $region51: #{tpu_custom_call.1} parent=47 // pred_region
        %s295 = smul.u32 2, %s23
        %p296 = scmp.lt.s32.totalorder %s22, 5
        %s297 = scalar_select %p296, %s22, 5
        %p298 = scmp.lt.s32.totalorder %s295, 1
        %s299 = scalar_select %p298, %s295, 1
        %s300 = smul.addr %s297, 2
        %s301 = sadd.s32 %s299, %s300
        %s302 = smul.addr %s301, 2
        %s303 = scalar_lea.vmem %s0, %s302
        %s304 = smul.u32 2, %s23
      $region52: #{tpu_custom_call.1} parent=47 // pred_fallthru
        _
    $region48: #{tpu_custom_call.1} parent=5 // pred_fallthru
      _
    %p305 = scmp.le.s32.totalorder 1, %s15
    %p306 = scmp.lt.s32.totalorder %s15, 7
    %p307 = pnand %p305, %p306
    %p308 = pneg %p307
    // Predicated region
    $region53: #{tpu_custom_call.1} parent=5 // pred_check
      _
    $region54: #{tpu_custom_call.1} parent=5 // pred_check_branch
      %310 = sbr.rel (%p307) target = $region56
    $region55: #{tpu_custom_call.1} parent=5 // pred_region
      %s311 = ssub.s32 %s15, 1
      %s312 = smul.u32 2, %s25
      %p313 = scmp.lt.s32.totalorder %s24, 5
      %s314 = scalar_select %p313, %s24, 5
      %p315 = scmp.lt.s32.totalorder %s312, 1
      %s316 = scalar_select %p315, %s312, 1
      %s317 = smul.addr %s314, 2
      %s318 = sadd.s32 %s316, %s317
      %s319 = smul.addr %s318, 2
      %s320 = scalar_lea.vmem %s0, %s319
      %p321 = pneg %p55
      %p322 = pneg %p52
      %p323 = pneg %p76
      %p324 = pneg %p73
      %p325 = pneg %p97
      %p326 = pneg %p94
      %p327 = pneg %p118
      %p328 = pneg %p115
      %p329 = pneg %p139
      %p330 = pneg %p136
      %p331 = pneg %p160
      %p332 = pneg %p157
      %p333 = pneg %p181
      %p334 = pneg %p178
      %p335 = pneg %p202
      %p336 = pneg %p199
      %p337 = pneg %p223
      %p338 = pneg %p220
      %p339 = pneg %p249
      %p340 = pneg %p246
      %p341 = scmp.lt.s32.totalorder %s24, 5
      %s342 = scalar_select %p341, %s24, 5
      %s343 = smul.addr %s342, 4
      %s344 = smul.addr %s343, 8
      %s345 = scalar_lea.vmem %s9, %s344
      %s346 = smul.u32 2, %s25
      %p347 = scmp.lt.s32.totalorder %s24, 5
      %s348 = scalar_select %p347, %s24, 5
      %p349 = scmp.lt.s32.totalorder %s346, 1
      %s350 = scalar_select %p349, %s346, 1
      %s351 = smul.addr %s348, 2
      %s352 = sadd.s32 %s350, %s351
      %s353 = smul.addr %s352, 2
      %s354 = scalar_lea.vmem %s0, %s353
      %s355 = smul.u32 2, %s25
      %p356 = scmp.lt.s32.totalorder %s24, 5
      %s357 = scalar_select %p356, %s24, 5
      %s358 = smul.addr %s357, 4
      %s359 = smul.addr %s358, 8
      %s360 = scalar_lea.vmem %s9, %s359
      %p362 = scmp.eq.s32.totalorder %s25, 0
      // Predicated region
      $region57: #{tpu_custom_call.1} parent=55 // pred_check
        %p363 = pneg %p362
      $region58: #{tpu_custom_call.1} parent=55 // pred_check_branch
        %365 = sbr.rel (%p363) target = $region60
      $region59: #{tpu_custom_call.1} parent=55 // pred_region
        %366 = vst [vmem:[#allocation2] sm:$0xff] 0.0
        %367 = vst [vmem:[#allocation2 + $0x8] sm:$0xff] 0.0
        %368 = vst [vmem:[#allocation2 + $0x10] sm:$0xff] 0.0
        %369 = vst [vmem:[#allocation2 + $0x18] sm:$0xff] 0.0
        %370 = vst [vmem:[#allocation2 + $0x20] sm:$0xff] 0.0
        %371 = vst [vmem:[#allocation2 + $0x28] sm:$0xff] 0.0
        %372 = vst [vmem:[#allocation2 + $0x30] sm:$0xff] 0.0
        %373 = vst [vmem:[#allocation2 + $0x38] sm:$0xff] 0.0
      $region60: #{tpu_custom_call.1} parent=55 // pred_fallthru
        _
      %v374 = vld [vmem:[%s354] sm:$0xf]
      %v375 = vld [vmem:[%s1] sm:$0xf]
      %v376 = vld [vmem:[%s1 + $0x4] sm:$0xf]
      %v377 = vld [vmem:[%s2] sm:$0xff]
      %v378 = vld [vmem:[%s2 + $0x8] sm:$0xff]
      %380 = vset.pattern.permute.xlu0 0
      %381 = vperm.xlu0 %380, %v377
      %v382 = vpop.permute.xlu0 %381
      %385 = vset.pattern.permute.xlu0 0
      %386 = vperm.xlu0 %385, %v378
      %v387 = vpop.permute.xlu0 %386
      %v391 = vunpack.c.l.b16 %v375
      %v392 = vunpack.c.l.b16 %v376
      %v393 = vpack.c.b16 %v392, %v391
      %v396 = vunpack.c.l.s4 1983009808
      %v397 = vunpack.c.0.s8 %v396
      %v398 = vlaneseq
      %v399 = vshrl.u32 %v398, 7
      %v400 = vsub.s32 %v397, %v399
      %v401 = vrot.slane %v374, %v400
      %v402 = vcombine.high %v401, %v401
      %vm403 = vcmask 23552
      %v405 = vsel %vm403, %v393, 0
      %vm407 = vcmask 1040384
      %vm408 = vcmask 1041408
      %v409 = vsel %vm407, 4294967295, 65535
      %v410 = vsel %vm408, %v409, 0
      %v412 = vand.u32 %v401, %v410
      %v415 = vand.u32 %v402, %v410
      %417 = vmatprep.subr.bf16.mxu0 %v415
      %418 = vmatpush1.bf16.msra.mxu0 %v412
      %419 = vmatprep.subr.bf16.mxu0 0
      %420 = vmatpush1.bf16.msra.mxu0 0
      %421 = vmatprep.subr.bf16.mxu0 0
      %422 = vmatpush1.bf16.msra.mxu0 0
      %423 = vmatprep.subr.bf16.mxu0 0
      %424 = vmatpush1.bf16.msra.mxu0 0
      %425 = vmatprep.subr.bf16.mxu0 0
      %426 = vmatpush1.bf16.msra.mxu0 0
      %427 = vmatprep.subr.bf16.mxu0 0
      %428 = vmatpush1.bf16.msra.mxu0 0
      %429 = vmatprep.subr.bf16.mxu0 0
      %430 = vmatpush1.bf16.msra.mxu0 0
      %431 = vmatprep.subr.bf16.mxu0 0
      %432 = vmatpush1.bf16.msra.mxu0 0
      %433 = vmatprep.subr.bf16.mxu0 0
      %434 = vmatpush1.bf16.msra.mxu0 0
      %435 = vmatprep.subr.bf16.mxu0 0
      %436 = vmatpush1.bf16.msra.mxu0 0
      %437 = vmatprep.subr.bf16.mxu0 0
      %438 = vmatpush1.bf16.msra.mxu0 0
      %439 = vmatprep.subr.bf16.mxu0 0
      %440 = vmatpush1.bf16.msra.mxu0 0
      %441 = vmatprep.subr.bf16.mxu0 0
      %442 = vmatpush1.bf16.msra.mxu0 0
      %443 = vmatprep.subr.bf16.mxu0 0
      %444 = vmatpush1.bf16.msra.mxu0 0
      %445 = vmatprep.subr.bf16.mxu0 0
      %446 = vmatpush1.bf16.msra.mxu0 0
      %447 = vmatprep.subr.bf16.mxu0 0
      %448 = vmatpush1.bf16.msra.mxu0 0
      %449 = vmatprep.mubr.bf16.mxu0 0
      %450 = vmatmul.mubr.bf16.gmra.mrb[0].mxu0 %v405
      %v451 = vpop.f32.mrb[0].mxu0
      %v452 = vadd.f32 %v382, %v451
      %v453 = vpop.f32.mrb[0].mxu0
      %v454 = vadd.f32 %v382, %v453
      %v455 = vpop.f32.mrb[0].mxu0
      %v456 = vadd.f32 %v387, %v455
      %v457 = vpop.f32.mrb[0].mxu0
      %v458 = vadd.f32 %v387, %v457
      %459 = vdwg.mxu0
      %v460 = vmax.f32 %v452, 0.0
      %v461 = vmax.f32 %v454, 0.0
      %v462 = vmax.f32 %v456, 0.0
      %v463 = vmax.f32 %v458, 0.0
      %v464 = vld [vmem:[%s3] sm:$0xf]
      %v465 = vld [vmem:[%s3 + $0x4] sm:$0xf]
      %v466 = vld [vmem:[%s3 + $0x8] sm:$0xf]
      %v467 = vpack.c.bf16 %v462, %v460
      %v468 = vpack.c.bf16 %v463, %v461
      %v469 = vld [vmem:[%s4] sm:$0xff]
      %v470 = vld [vmem:[%s4 + $0x8] sm:$0xff]
      %v471 = vld [vmem:[%s4 + $0x10] sm:$0xff]
      %473 = vset.pattern.permute.xlu0 0
      %474 = vperm.xlu0 %473, %v469
      %v475 = vpop.permute.xlu0 %474
      %478 = vset.pattern.permute.xlu0 0
      %479 = vperm.xlu0 %478, %v470
      %v480 = vpop.permute.xlu0 %479
      %483 = vset.pattern.permute.xlu0 0
      %484 = vperm.xlu0 %483, %v471
      %v485 = vpop.permute.xlu0 %484
      %v490 = vunpack.c.l.b16 %v464
      %v491 = vunpack.c.l.b16 %v465
      %v492 = vunpack.c.l.b16 %v466
      %v493 = vpack.c.b16 %v491, %v490
      %v494 = vpack.c.b16 %v492, %v492
      %vm495 = vcmask 130048
      %v497 = vsel %vm495, %v493, 0
      %v500 = vsel %vm495, %v494, 0
      %502 = vmatprep.subr.bf16.mxu0 %v468
      %503 = vmatpush1.bf16.msra.mxu0 %v467
      %504 = vmatprep.subr.bf16.mxu0 0
      %505 = vmatpush1.bf16.msra.mxu0 0
      %506 = vmatprep.subr.bf16.mxu0 0
      %507 = vmatpush1.bf16.msra.mxu0 0
      %508 = vmatprep.subr.bf16.mxu0 0
      %509 = vmatpush1.bf16.msra.mxu0 0
      %510 = vmatprep.subr.bf16.mxu0 0
      %511 = vmatpush1.bf16.msra.mxu0 0
      %512 = vmatprep.subr.bf16.mxu0 0
      %513 = vmatpush1.bf16.msra.mxu0 0
      %514 = vmatprep.subr.bf16.mxu0 0
      %515 = vmatpush1.bf16.msra.mxu0 0
      %516 = vmatprep.subr.bf16.mxu0 0
      %517 = vmatpush1.bf16.msra.mxu0 0
      %518 = vmatprep.subr.bf16.mxu0 0
      %519 = vmatpush1.bf16.msra.mxu0 0
      %520 = vmatprep.subr.bf16.mxu0 0
      %521 = vmatpush1.bf16.msra.mxu0 0
      %522 = vmatprep.subr.bf16.mxu0 0
      %523 = vmatpush1.bf16.msra.mxu0 0
      %524 = vmatprep.subr.bf16.mxu0 0
      %525 = vmatpush1.bf16.msra.mxu0 0
      %526 = vmatprep.subr.bf16.mxu0 0
      %527 = vmatpush1.bf16.msra.mxu0 0
      %528 = vmatprep.subr.bf16.mxu0 0
      %529 = vmatpush1.bf16.msra.mxu0 0
      %530 = vmatprep.subr.bf16.mxu0 0
      %531 = vmatpush1.bf16.msra.mxu0 0
      %532 = vmatprep.subr.bf16.mxu0 0
      %533 = vmatpush1.bf16.msra.mxu0 0
      %534 = vmatprep.mubr.bf16.mxu0 0
      %535 = vmatmul.mubr.bf16.gmra.mrb[0].mxu0 %v497
      %v536 = vpop.f32.mrb[0].mxu0
      %v537 = vadd.f32 %v475, %v536
      %v538 = vpop.f32.mrb[0].mxu0
      %v539 = vadd.f32 %v475, %v538
      %v540 = vpop.f32.mrb[0].mxu0
      %v541 = vadd.f32 %v480, %v540
      %v542 = vpop.f32.mrb[0].mxu0
      %v543 = vadd.f32 %v480, %v542
      %544 = vmatprep.mubr.bf16.mxu0 0
      %545 = vmatmul.mubr.bf16.gmra.mrb[0].mxu0 %v500
      %v546 = vpop.f32.mrb[0].mxu0
      %v547 = vadd.f32 %v485, %v546
      %v548 = vpop.f32.mrb[0].mxu0
      %v549 = vadd.f32 %v485, %v548
      %v550 = vpop.f32.mrb[0].mxu0
      %v551 = vpop.f32.mrb[0].mxu0
      %552 = vdwg.mxu0
      %v553 = vmax.f32 %v537, 0.0
      %v554 = vmax.f32 %v539, 0.0
      %v555 = vmax.f32 %v541, 0.0
      %v556 = vmax.f32 %v543, 0.0
      %v557 = vmax.f32 %v547, 0.0
      %v558 = vmax.f32 %v549, 0.0
      %v559 = vld [vmem:[%s5] sm:$0xf]
      %v560 = vld [vmem:[%s5 + $0x4] sm:$0xf]
      %v561 = vld [vmem:[%s5 + $0x8] sm:$0xf]
      %v562 = vld [vmem:[%s5 + $0xc] sm:$0xf]
      %v563 = vpack.c.bf16 %v555, %v553
      %v564 = vpack.c.bf16 %v556, %v554
      %v565 = vpack.c.bf16 %v557, %v557
      %v566 = vpack.c.bf16 %v558, %v558
      %v567 = vld [vmem:[%s6] sm:$0xff]
      %v568 = vld [vmem:[%s6 + $0x8] sm:$0xff]
      %v569 = vld [vmem:[%s6 + $0x10] sm:$0xff]
      %v570 = vld [vmem:[%s6 + $0x18] sm:$0xff]
      %572 = vset.pattern.permute.xlu0 0
      %573 = vperm.xlu0 %572, %v567
      %v574 = vpop.permute.xlu0 %573
      %577 = vset.pattern.permute.xlu0 0
      %578 = vperm.xlu0 %577, %v568
      %v579 = vpop.permute.xlu0 %578
      %582 = vset.pattern.permute.xlu0 0
      %583 = vperm.xlu0 %582, %v569
      %v584 = vpop.permute.xlu0 %583
      %587 = vset.pattern.permute.xlu0 0
      %588 = vperm.xlu0 %587, %v570
      %v589 = vpop.permute.xlu0 %588
      %v595 = vunpack.c.l.b16 %v559
      %v596 = vunpack.c.l.b16 %v560
      %v597 = vunpack.c.l.b16 %v561
      %v598 = vunpack.c.l.b16 %v562
      %v599 = vpack.c.b16 %v596, %v595
      %v600 = vpack.c.b16 %v598, %v597
      %vm601 = vcmask 195584
      %v603 = vsel %vm601, %v599, 0
      %v606 = vsel %vm601, %v600, 0
      %vm608 = vcmask 1043456
      %v610 = vsel %vm608, %v565, 0
      %v613 = vsel %vm608, %v566, 0
      %615 = vmatprep.subr.bf16.mxu0 %v564
      %616 = vmatpush1.bf16.msra.mxu0 %v563
      %617 = vmatprep.subr.bf16.mxu0 %v613
      %618 = vmatpush1.bf16.msra.mxu0 %v610
      %619 = vmatprep.subr.bf16.mxu0 0
      %620 = vmatpush1.bf16.msra.mxu0 0
      %621 = vmatprep.subr.bf16.mxu0 0
      %622 = vmatpush1.bf16.msra.mxu0 0
      %623 = vmatprep.subr.bf16.mxu0 0
      %624 = vmatpush1.bf16.msra.mxu0 0
      %625 = vmatprep.subr.bf16.mxu0 0
      %626 = vmatpush1.bf16.msra.mxu0 0
      %627 = vmatprep.subr.bf16.mxu0 0
      %628 = vmatpush1.bf16.msra.mxu0 0
      %629 = vmatprep.subr.bf16.mxu0 0
      %630 = vmatpush1.bf16.msra.mxu0 0
      %631 = vmatprep.subr.bf16.mxu0 0
      %632 = vmatpush1.bf16.msra.mxu0 0
      %633 = vmatprep.subr.bf16.mxu0 0
      %634 = vmatpush1.bf16.msra.mxu0 0
      %635 = vmatprep.subr.bf16.mxu0 0
      %636 = vmatpush1.bf16.msra.mxu0 0
      %637 = vmatprep.subr.bf16.mxu0 0
      %638 = vmatpush1.bf16.msra.mxu0 0
      %639 = vmatprep.subr.bf16.mxu0 0
      %640 = vmatpush1.bf16.msra.mxu0 0
      %641 = vmatprep.subr.bf16.mxu0 0
      %642 = vmatpush1.bf16.msra.mxu0 0
      %643 = vmatprep.subr.bf16.mxu0 0
      %644 = vmatpush1.bf16.msra.mxu0 0
      %645 = vmatprep.subr.bf16.mxu0 0
      %646 = vmatpush1.bf16.msra.mxu0 0
      %647 = vmatprep.mubr.bf16.mxu0 0
      %648 = vmatmul.mubr.bf16.gmra.mrb[0].mxu0 %v603
      %v649 = vpop.f32.mrb[0].mxu0
      %v650 = vadd.f32 %v574, %v649
      %v651 = vpop.f32.mrb[0].mxu0
      %v652 = vadd.f32 %v574, %v651
      %v653 = vpop.f32.mrb[0].mxu0
      %v654 = vadd.f32 %v579, %v653
      %v655 = vpop.f32.mrb[0].mxu0
      %v656 = vadd.f32 %v579, %v655
      %657 = vmatprep.mubr.bf16.mxu0 0
      %658 = vmatmul.mubr.bf16.gmra.mrb[0].mxu0 %v606
      %v659 = vpop.f32.mrb[0].mxu0
      %v660 = vadd.f32 %v584, %v659
      %v661 = vpop.f32.mrb[0].mxu0
      %v662 = vadd.f32 %v584, %v661
      %v663 = vpop.f32.mrb[0].mxu0
      %v664 = vadd.f32 %v589, %v663
      %v665 = vpop.f32.mrb[0].mxu0
      %v666 = vadd.f32 %v589, %v665
      %667 = vdwg.mxu0
      %v668 = vmax.f32 %v650, 0.0
      %v669 = vmax.f32 %v652, 0.0
      %v670 = vmax.f32 %v654, 0.0
      %v671 = vmax.f32 %v656, 0.0
      %v672 = vmax.f32 %v660, 0.0
      %v673 = vmax.f32 %v662, 0.0
      %v674 = vmax.f32 %v664, 0.0
      %v675 = vmax.f32 %v666, 0.0
      %v676 = vld [vmem:[%s7] sm:$0xf]
      %v677 = vld [vmem:[%s7 + $0x4] sm:$0xf]
      %v678 = vld [vmem:[%s7 + $0x8] sm:$0xf]
      %v679 = vld [vmem:[%s7 + $0xc] sm:$0xf]
      %v680 = vpack.c.bf16 %v670, %v668
      %v681 = vpack.c.bf16 %v671, %v669
      %v682 = vpack.c.bf16 %v674, %v672
      %v683 = vpack.c.bf16 %v675, %v673
      %v684 = vld [vmem:[%s8] sm:$0xff]
      %v685 = vld [vmem:[%s8 + $0x8] sm:$0xff]
      %v686 = vld [vmem:[%s8 + $0x10] sm:$0xff]
      %v687 = vld [vmem:[%s8 + $0x18] sm:$0xff]
      %689 = vset.pattern.permute.xlu0 0
      %690 = vperm.xlu0 %689, %v684
      %v691 = vpop.permute.xlu0 %690
      %694 = vset.pattern.permute.xlu0 0
      %695 = vperm.xlu0 %694, %v685
      %v696 = vpop.permute.xlu0 %695
      %699 = vset.pattern.permute.xlu0 0
      %700 = vperm.xlu0 %699, %v686
      %v701 = vpop.permute.xlu0 %700
      %704 = vset.pattern.permute.xlu0 0
      %705 = vperm.xlu0 %704, %v687
      %v706 = vpop.permute.xlu0 %705
      %v712 = vunpack.c.l.b16 %v676
      %v713 = vunpack.c.l.b16 %v677
      %v714 = vunpack.c.l.b16 %v678
      %v715 = vunpack.c.l.b16 %v679
      %v716 = vpack.c.b16 %v713, %v712
      %v717 = vpack.c.b16 %v715, %v714
      %vm718 = vcmask 261120
      %v720 = vsel %vm718, %v716, 0
      %v723 = vsel %vm718, %v717, 0
      %725 = vmatprep.subr.bf16.mxu0 %v681
      %726 = vmatpush1.bf16.msra.mxu0 %v680
      %727 = vmatprep.subr.bf16.mxu0 %v683
      %728 = vmatpush1.bf16.msra.mxu0 %v682
      %729 = vmatprep.subr.bf16.mxu0 0
      %730 = vmatpush1.bf16.msra.mxu0 0
      %731 = vmatprep.subr.bf16.mxu0 0
      %732 = vmatpush1.bf16.msra.mxu0 0
      %733 = vmatprep.subr.bf16.mxu0 0
      %734 = vmatpush1.bf16.msra.mxu0 0
      %735 = vmatprep.subr.bf16.mxu0 0
      %736 = vmatpush1.bf16.msra.mxu0 0
      %737 = vmatprep.subr.bf16.mxu0 0
      %738 = vmatpush1.bf16.msra.mxu0 0
      %739 = vmatprep.subr.bf16.mxu0 0
      %740 = vmatpush1.bf16.msra.mxu0 0
      %741 = vmatprep.subr.bf16.mxu0 0
      %742 = vmatpush1.bf16.msra.mxu0 0
      %743 = vmatprep.subr.bf16.mxu0 0
      %744 = vmatpush1.bf16.msra.mxu0 0
      %745 = vmatprep.subr.bf16.mxu0 0
      %746 = vmatpush1.bf16.msra.mxu0 0
      %747 = vmatprep.subr.bf16.mxu0 0
      %748 = vmatpush1.bf16.msra.mxu0 0
      %749 = vmatprep.subr.bf16.mxu0 0
      %750 = vmatpush1.bf16.msra.mxu0 0
      %751 = vmatprep.subr.bf16.mxu0 0
      %752 = vmatpush1.bf16.msra.mxu0 0
      %753 = vmatprep.subr.bf16.mxu0 0
      %754 = vmatpush1.bf16.msra.mxu0 0
      %755 = vmatprep.subr.bf16.mxu0 0
      %756 = vmatpush1.bf16.msra.mxu0 0
      %757 = vmatprep.mubr.bf16.mxu0 0
      %758 = vmatmul.mubr.bf16.gmra.mrb[0].mxu0 %v720
      %v759 = vpop.f32.mrb[0].mxu0
      %v760 = vadd.f32 %v691, %v759
      %v761 = vpop.f32.mrb[0].mxu0
      %v762 = vadd.f32 %v691, %v761
      %v763 = vpop.f32.mrb[0].mxu0
      %v764 = vadd.f32 %v696, %v763
      %v765 = vpop.f32.mrb[0].mxu0
      %v766 = vadd.f32 %v696, %v765
      %767 = vmatprep.mubr.bf16.mxu0 0
      %768 = vmatmul.mubr.bf16.gmra.mrb[0].mxu0 %v723
      %v769 = vpop.f32.mrb[0].mxu0
      %v770 = vadd.f32 %v701, %v769
      %v771 = vpop.f32.mrb[0].mxu0
      %v772 = vadd.f32 %v701, %v771
      %v773 = vpop.f32.mrb[0].mxu0
      %v774 = vadd.f32 %v706, %v773
      %v775 = vpop.f32.mrb[0].mxu0
      %v776 = vadd.f32 %v706, %v775
      %777 = vdwg.mxu0
      %v778 = vmax.f32 %v760, 0.0
      %v779 = vmax.f32 %v762, 0.0
      %v780 = vmax.f32 %v764, 0.0
      %v781 = vmax.f32 %v766, 0.0
      %v782 = vmax.f32 %v770, 0.0
      %v783 = vmax.f32 %v772, 0.0
      %v784 = vmax.f32 %v774, 0.0
      %v785 = vmax.f32 %v776, 0.0
      %v786 = vld [vmem:[#allocation2] sm:$0xff]
      %v787 = vld [vmem:[#allocation2 + $0x8] sm:$0xff]
      %v788 = vld [vmem:[#allocation2 + $0x10] sm:$0xff]
      %v789 = vld [vmem:[#allocation2 + $0x18] sm:$0xff]
      %v790 = vld [vmem:[#allocation2 + $0x20] sm:$0xff]
      %v791 = vld [vmem:[#allocation2 + $0x28] sm:$0xff]
      %v792 = vld [vmem:[#allocation2 + $0x30] sm:$0xff]
      %v793 = vld [vmem:[#allocation2 + $0x38] sm:$0xff]
      %v794 = vadd.f32 %v786, %v778
      %v795 = vadd.f32 %v787, %v779
      %v796 = vadd.f32 %v788, %v780
      %v797 = vadd.f32 %v789, %v781
      %v798 = vadd.f32 %v790, %v782
      %v799 = vadd.f32 %v791, %v783
      %v800 = vadd.f32 %v792, %v784
      %v801 = vadd.f32 %v793, %v785
      %802 = vst [vmem:[#allocation2] sm:$0xff] %v794
      %803 = vst [vmem:[#allocation2 + $0x8] sm:$0xff] %v795
      %804 = vst [vmem:[#allocation2 + $0x10] sm:$0xff] %v796
      %805 = vst [vmem:[#allocation2 + $0x18] sm:$0xff] %v797
      %806 = vst [vmem:[#allocation2 + $0x20] sm:$0xff] %v798
      %807 = vst [vmem:[#allocation2 + $0x28] sm:$0xff] %v799
      %808 = vst [vmem:[#allocation2 + $0x30] sm:$0xff] %v800
      %809 = vst [vmem:[#allocation2 + $0x38] sm:$0xff] %v801
      // Predicated region
      $region61: #{tpu_custom_call.1} parent=55 // pred_check
        %p810 = pneg %p362
      $region62: #{tpu_custom_call.1} parent=55 // pred_check_branch
        %812 = sbr.rel (%p810) target = $region64
      $region63: #{tpu_custom_call.1} parent=55 // pred_region
        %v813 = vld [vmem:[#allocation2] sm:$0xff]
        %v814 = vld [vmem:[#allocation2 + $0x8] sm:$0xff]
        %v815 = vld [vmem:[#allocation2 + $0x10] sm:$0xff]
        %v816 = vld [vmem:[#allocation2 + $0x18] sm:$0xff]
        %v817 = vld [vmem:[#allocation2 + $0x20] sm:$0xff]
        %v818 = vld [vmem:[#allocation2 + $0x28] sm:$0xff]
        %v819 = vld [vmem:[#allocation2 + $0x30] sm:$0xff]
        %v820 = vld [vmem:[#allocation2 + $0x38] sm:$0xff]
        %v821 = vadd.f32 %v813, %v814
        %822 = vadd.xlane.f32.xlu0 %v821
        %v823 = vpop.xlane.xlu0 %822
        %v824 = vadd.f32 %v815, %v816
        %825 = vadd.xlane.f32.xlu0 %v824
        %v826 = vpop.xlane.xlu0 %825
        %v827 = vadd.f32 %v817, %v818
        %828 = vadd.xlane.f32.xlu0 %v827
        %v829 = vpop.xlane.xlu0 %828
        %v830 = vadd.f32 %v819, %v820
        %831 = vadd.xlane.f32.xlu0 %v830
        %v832 = vpop.xlane.xlu0 %831
        %v833 = vmul.f32 %v823, 0.00390625
        %v834 = vmul.f32 %v826, 0.00390625
        %v835 = vmul.f32 %v829, 0.00390625
        %v836 = vmul.f32 %v832, 0.00390625
        %vm837 = vcmask 7168
        %838 = vst.msk [vmem:[%s360] sm:$0xff] %vm837, %v833
        %839 = vst.msk [vmem:[%s360 + $0x8] sm:$0xff] %vm837, %v834
        %840 = vst.msk [vmem:[%s360 + $0x10] sm:$0xff] %vm837, %v835
        %841 = vst.msk [vmem:[%s360 + $0x18] sm:$0xff] %vm837, %v836
      $region64: #{tpu_custom_call.1} parent=55 // pred_fallthru
        _
      %p842 = scmp.lt.s32.totalorder %s24, 5
      %s843 = scalar_select %p842, %s24, 5
      %s844 = smul.addr %s843, 4
      %s845 = smul.addr %s844, 8
      %s846 = scalar_lea.vmem %s9, %s845
      // Predicated region
      $region65: #{tpu_custom_call.1} parent=55 // pred_check
        %p847 = pneg %p246
      $region66: #{tpu_custom_call.1} parent=55 // pred_check_branch
        %849 = sbr.rel (%p847) target = $region68
      $region67: #{tpu_custom_call.1} parent=55 // pred_region
        _
      $region68: #{tpu_custom_call.1} parent=55 // pred_fallthru
        _
    $region56: #{tpu_custom_call.1} parent=5 // pred_fallthru
      _
    %p850 = scmp.le.s32.totalorder 2, %s15
    // Predicated region
    $region69: #{tpu_custom_call.1} parent=5 // pred_check
      %p851 = pneg %p850
    $region70: #{tpu_custom_call.1} parent=5 // pred_check_branch
      %853 = sbr.rel (%p851) target = $region72
    $region71: #{tpu_custom_call.1} parent=5 // pred_region
      %s854 = ssub.s32 %s15, 2
      // Predicated region
      $region73: #{tpu_custom_call.1} parent=71 // pred_check
        %p855 = pneg %p252
      $region74: #{tpu_custom_call.1} parent=71 // pred_check_branch
        %857 = sbr.rel (%p855) target = $region76
      $region75: #{tpu_custom_call.1} parent=71 // pred_region
        %p858 = scmp.lt.s32.totalorder %s26, 5
        %s859 = scalar_select %p858, %s26, 5
        %s860 = smul.addr %s859, 4
        %s861 = smul.addr %s860, 8
        %s862 = scalar_lea.vmem %s9, %s861
      $region76: #{tpu_custom_call.1} parent=71 // pred_fallthru
        _
    $region72: #{tpu_custom_call.1} parent=5 // pred_fallthru
      _
  $region6: #{tpu_custom_call.1} parent=0 // loop_footer
    %s19 = sadd.s32 1, %s15
  $region7: #{tpu_custom_call.1} parent=0 // loop_footer_branch
    %14 = sbr.rel target = $region3
  $region8: #{tpu_custom_call.1} parent=0 // loop_exit
    _

</llo_original>
